<compile_context>
chip_gen: v7x
topology: tpu7x:2x2x1
jax: 0.10.0
libtpu: 0.0.40
codegen_flags: <defaults>
</compile_context>

<pallas_src>
import functools

import jax
import jax.numpy as jnp
from jax.experimental import pallas as pl
from jax.experimental.pallas import tpu as pltpu

LN_EPS = 1e-5  # PyTorch nn.LayerNorm default


def _ln(v, gamma, beta):
    """Row-wise LayerNorm, single reduction pass (E[v], E[v^2])."""
    mu = jnp.mean(v, axis=-1, keepdims=True)
    ex2 = jnp.mean(v * v, axis=-1, keepdims=True)
    var = jnp.maximum(ex2 - mu * mu, 0.0)
    inv = jax.lax.rsqrt(var + LN_EPS)
    return (v - mu) * inv * gamma + beta


def _dual_patch_norm_kernel(x_ref, g1_ref, b1_ref, w_ref, bw_ref, g2_ref,
                            b2_ref, o_ref):
    # x_ref: (TM, D_in) tile of patch rows.
    x = x_ref[...].astype(jnp.float32)
    y = _ln(x, g1_ref[...], b1_ref[...])                    # norm1 over D_in
    z = jnp.dot(y, w_ref[...].astype(jnp.float32),
                preferred_element_type=jnp.float32) + bw_ref[...]
    out = _ln(z, g2_ref[...], b2_ref[...])                  # norm2 over D_out
    # TODO(synk): D_out < 128 leaves this store lane-masked; packing several rows
    # into one 128-lane output row needs a minor-dim relayout (reshape/concat at
    # non-128 offsets) that is not reliably lowerable here, so it is deferred.
    o_ref[...] = out.astype(o_ref.dtype)


def _round_up(a, b):
    return (a + b - 1) // b * b


def _patchify_nchw(x, patch_size):
    # einops: 'b c (h p1) (w p2) -> b (h w) (p1 p2 c)'
    # TODO(synk): this rearrange stays as XLA layout glue (one extra HBM round
    # trip); fusing it into the kernel needs a non-rectangular per-patch gather.
    B, C, H, W = x.shape
    P = patch_size
    h, w = H // P, W // P
    x = x.reshape(B, C, h, P, w, P)
    x = jnp.transpose(x, (0, 2, 4, 3, 5, 1))      # (B, h, w, p1, p2, c)
    return x.reshape(B, h * w, P * P * C)


def _choose_tm(m, tm_target=1024):
    """Largest sublane-aligned row tile <= tm_target; prefer >=2 grid steps
    (when each step is still big enough to amortise per-step overhead) so the
    parallel axis can shard across v7x's two TensorCores."""
    tm = min(tm_target, _round_up(m, 8))
    if m <= tm_target:
        half = _round_up(pl.cdiv(m, 2), 8)
        if half >= 256:
            tm = min(tm, half)
    return max(tm, 8)


@functools.partial(jax.jit, static_argnames=("patch_size",))
def dual_patch_norm(x, params, *, patch_size):
    """x: (B, C, H, W) float32. Returns (B, num_patches, patch_dim)."""
    g1, b1, w, bw, g2, b2 = params
    patches = _patchify_nchw(x, patch_size)        # (B, N, D_in)
    B, N, D_in = patches.shape
    D_out = w.shape[1]
    M = B * N
    flat = patches.reshape(M, D_in)

    TM = _choose_tm(M)
    M_pad = _round_up(M, TM)
    if M_pad != M:
        # Rows are independent; zero rows pass safely through both LayerNorms.
        flat = jnp.pad(flat, ((0, M_pad - M), (0, 0)))
    grid = (M_pad // TM,)

    cost = pl.CostEstimate(
        flops=2 * M_pad * D_in * D_out + 8 * M_pad * (D_in + D_out),
        transcendentals=2 * M_pad,
        bytes_accessed=4 * (M_pad * (D_in + D_out) + D_in * D_out
                            + 2 * D_in + 3 * D_out),
    )

    out = pl.pallas_call(
        _dual_patch_norm_kernel,
        out_shape=jax.ShapeDtypeStruct((M_pad, D_out), jnp.float32),
        grid_spec=pltpu.PrefetchScalarGridSpec(
            num_scalar_prefetch=0,
            grid=grid,
            in_specs=[
                pl.BlockSpec((TM, D_in), lambda i: (i, 0)),     # patch rows
                pl.BlockSpec((1, D_in), lambda i: (0, 0)),      # norm1 gamma
                pl.BlockSpec((1, D_in), lambda i: (0, 0)),      # norm1 beta
                pl.BlockSpec((D_in, D_out), lambda i: (0, 0)),  # proj weight
                pl.BlockSpec((1, D_out), lambda i: (0, 0)),     # proj bias
                pl.BlockSpec((1, D_out), lambda i: (0, 0)),     # norm2 gamma
                pl.BlockSpec((1, D_out), lambda i: (0, 0)),     # norm2 beta
            ],
            out_specs=pl.BlockSpec((TM, D_out), lambda i: (i, 0)),
        ),
        compiler_params=pltpu.CompilerParams(
            dimension_semantics=("parallel",)),
        cost_estimate=cost,
    )(flat, g1, b1, w, bw, g2, b2)

    return out[:M].reshape(B, N, D_out)


def init_params(key, patch_size, patch_dim, num_channels):
    d_in = patch_size * patch_size * num_channels
    k1, k2, k3, k4, k5, k6 = jax.random.split(key, 6)
    # LayerNorm params perturbed away from identity so broadcasting is exercised.
    g1 = (1.0 + 0.1 * jax.random.normal(k1, (1, d_in))).astype(jnp.float32)
    b1 = (0.1 * jax.random.normal(k2, (1, d_in))).astype(jnp.float32)
    # Linear: stored already transposed as (D_in, D_out) so the kernel does y @ W.
    w = (0.02 * jax.random.normal(k3, (d_in, patch_dim))).astype(jnp.float32)
    bw = (0.1 * jax.random.normal(k4, (1, patch_dim))).astype(jnp.float32)
    g2 = (1.0 + 0.1 * jax.random.normal(k5, (1, patch_dim))).astype(jnp.float32)
    b2 = (0.1 * jax.random.normal(k6, (1, patch_dim))).astype(jnp.float32)
    return g1, b1, w, bw, g2, b2


def _reference(x, params, patch_size):
    # Pure-JAX reference of the PyTorch forward for a sanity check.
    g1, b1, w, bw, g2, b2 = params
    p = _patchify_nchw(x, patch_size)

    def ln(v, g, b):
        mu = v.mean(-1, keepdims=True)
        var = ((v - mu) ** 2).mean(-1, keepdims=True)
        return (v - mu) / jnp.sqrt(var + LN_EPS) * g + b

    y = ln(p, g1[0], b1[0])
    z = y @ w + bw[0]
    return ln(z, g2[0], b2[0])


if __name__ == "__main__":
    key = jax.random.PRNGKey(0)
    kx, kp = jax.random.split(key)

    patch_size = 4
    num_channels = 4
    patch_dim = 32
    B, H, W = 2, 16, 16          # -> 16 patches/image, D_in = 64

    x = jax.random.normal(kx, (B, num_channels, H, W), dtype=jnp.float32)
    params = init_params(kp, patch_size, patch_dim, num_channels)

    out = dual_patch_norm(x, params, patch_size=patch_size)
    out = jax.block_until_ready(out)

    ref = _reference(x, params, patch_size)
    assert out.shape == (B, (H // patch_size) * (W // patch_size), patch_dim)
    assert jnp.allclose(out, ref, atol=1e-4, rtol=1e-4)

    print("KERNEL_OK")
</pallas_src>

<mosaic_0001>
module attributes {stable_mosaic.version = 11 : i64} {
  func.func @_dual_patch_norm_kernel(%arg0: i32, %arg1: memref<32x64xf32, #tpu.memory_space<vmem>>, %arg2: memref<1x64xf32, #tpu.memory_space<vmem>>, %arg3: memref<1x64xf32, #tpu.memory_space<vmem>>, %arg4: memref<64x32xf32, #tpu.memory_space<vmem>>, %arg5: memref<1x32xf32, #tpu.memory_space<vmem>>, %arg6: memref<1x32xf32, #tpu.memory_space<vmem>>, %arg7: memref<1x32xf32, #tpu.memory_space<vmem>>, %arg8: memref<32x32xf32, #tpu.memory_space<vmem>>) attributes {dimension_semantics = [#tpu.dimension_semantics<parallel>], iteration_bounds = array<i64: 1>, scalar_prefetch = 0 : i64, scratch_operands = 0 : i64, tpu.core_type = #tpu.core_type<tc>, window_params = [{transform_indices = @transform_0, window_bounds = array<i64: 32, 64>}, {pipeline_mode = #tpu.pipeline_mode<synchronous>, transform_indices = @transform_1, window_bounds = array<i64: 1, 64>}, {pipeline_mode = #tpu.pipeline_mode<synchronous>, transform_indices = @transform_2, window_bounds = array<i64: 1, 64>}, {pipeline_mode = #tpu.pipeline_mode<synchronous>, transform_indices = @transform_3, window_bounds = array<i64: 64, 32>}, {pipeline_mode = #tpu.pipeline_mode<synchronous>, transform_indices = @transform_4, window_bounds = array<i64: 1, 32>}, {pipeline_mode = #tpu.pipeline_mode<synchronous>, transform_indices = @transform_5, window_bounds = array<i64: 1, 32>}, {pipeline_mode = #tpu.pipeline_mode<synchronous>, transform_indices = @transform_6, window_bounds = array<i64: 1, 32>}, {transform_indices = @transform_7, window_bounds = array<i64: 32, 32>}]} {
    %c0 = arith.constant 0 : index
    %c0_0 = arith.constant 0 : index
    %0 = vector.load %arg1[%c0, %c0_0] : memref<32x64xf32, #tpu.memory_space<vmem>>, vector<32x64xf32>
    %c0_1 = arith.constant 0 : index
    %c0_2 = arith.constant 0 : index
    %1 = vector.load %arg2[%c0_1, %c0_2] : memref<1x64xf32, #tpu.memory_space<vmem>>, vector<1x64xf32>
    %c0_3 = arith.constant 0 : index
    %c0_4 = arith.constant 0 : index
    %2 = vector.load %arg3[%c0_3, %c0_4] : memref<1x64xf32, #tpu.memory_space<vmem>>, vector<1x64xf32>
    %cst = arith.constant dense<0.000000e+00> : vector<32xf32>
    %3 = vector.multi_reduction <add>, %0, %cst [1] : vector<32x64xf32> to vector<32xf32>
    %4 = vector.shape_cast %3 : vector<32xf32> to vector<32x1xf32>
    %cst_5 = arith.constant 6.400000e+01 : f32
    %5 = vector.broadcast %cst_5 : f32 to vector<32x1xf32>
    %6 = arith.divf %4, %5 : vector<32x1xf32>
    %7 = arith.mulf %0, %0 : vector<32x64xf32>
    %cst_6 = arith.constant dense<0.000000e+00> : vector<32xf32>
    %8 = vector.multi_reduction <add>, %7, %cst_6 [1] : vector<32x64xf32> to vector<32xf32>
    %9 = vector.shape_cast %8 : vector<32xf32> to vector<32x1xf32>
    %cst_7 = arith.constant 6.400000e+01 : f32
    %10 = vector.broadcast %cst_7 : f32 to vector<32x1xf32>
    %11 = arith.divf %9, %10 : vector<32x1xf32>
    %12 = arith.mulf %6, %6 : vector<32x1xf32>
    %13 = arith.subf %11, %12 : vector<32x1xf32>
    %cst_8 = arith.constant 0.000000e+00 : f32
    %14 = vector.broadcast %cst_8 : f32 to vector<32x1xf32>
    %15 = arith.maximumf %13, %14 : vector<32x1xf32>
    %cst_9 = arith.constant 9.99999974E-6 : f32
    %16 = vector.broadcast %cst_9 : f32 to vector<32x1xf32>
    %17 = arith.addf %15, %16 : vector<32x1xf32>
    %18 = math.rsqrt %17 : vector<32x1xf32>
    %19 = vector.broadcast %6 : vector<32x1xf32> to vector<32x64xf32>
    %20 = arith.subf %0, %19 : vector<32x64xf32>
    %21 = vector.broadcast %18 : vector<32x1xf32> to vector<32x64xf32>
    %22 = arith.mulf %20, %21 : vector<32x64xf32>
    %23 = vector.broadcast %1 : vector<1x64xf32> to vector<32x64xf32>
    %24 = arith.mulf %22, %23 : vector<32x64xf32>
    %25 = vector.broadcast %2 : vector<1x64xf32> to vector<32x64xf32>
    %26 = arith.addf %24, %25 : vector<32x64xf32>
    %c0_10 = arith.constant 0 : index
    %c0_11 = arith.constant 0 : index
    %27 = vector.load %arg4[%c0_10, %c0_11] : memref<64x32xf32, #tpu.memory_space<vmem>>, vector<64x32xf32>
    %cst_12 = arith.constant dense<0.000000e+00> : vector<32x32xf32>
    %28 = tpu.matmul %26, %27, %cst_12 {dimension_numbers = #tpu.dot_dimension_numbers<[1], [0], [0], [1], [0, 0, 1, 1], [], []>} : vector<32x64xf32>, vector<64x32xf32>, vector<32x32xf32> -> vector<32x32xf32>
    %c0_13 = arith.constant 0 : index
    %c0_14 = arith.constant 0 : index
    %29 = vector.load %arg5[%c0_13, %c0_14] : memref<1x32xf32, #tpu.memory_space<vmem>>, vector<1x32xf32>
    %30 = vector.broadcast %29 : vector<1x32xf32> to vector<32x32xf32>
    %31 = arith.addf %28, %30 : vector<32x32xf32>
    %c0_15 = arith.constant 0 : index
    %c0_16 = arith.constant 0 : index
    %32 = vector.load %arg6[%c0_15, %c0_16] : memref<1x32xf32, #tpu.memory_space<vmem>>, vector<1x32xf32>
    %c0_17 = arith.constant 0 : index
    %c0_18 = arith.constant 0 : index
    %33 = vector.load %arg7[%c0_17, %c0_18] : memref<1x32xf32, #tpu.memory_space<vmem>>, vector<1x32xf32>
    %cst_19 = arith.constant dense<0.000000e+00> : vector<32xf32>
    %34 = vector.multi_reduction <add>, %31, %cst_19 [1] : vector<32x32xf32> to vector<32xf32>
    %35 = vector.shape_cast %34 : vector<32xf32> to vector<32x1xf32>
    %cst_20 = arith.constant 3.200000e+01 : f32
    %36 = vector.broadcast %cst_20 : f32 to vector<32x1xf32>
    %37 = arith.divf %35, %36 : vector<32x1xf32>
    %38 = arith.mulf %31, %31 : vector<32x32xf32>
    %cst_21 = arith.constant dense<0.000000e+00> : vector<32xf32>
    %39 = vector.multi_reduction <add>, %38, %cst_21 [1] : vector<32x32xf32> to vector<32xf32>
    %40 = vector.shape_cast %39 : vector<32xf32> to vector<32x1xf32>
    %cst_22 = arith.constant 3.200000e+01 : f32
    %41 = vector.broadcast %cst_22 : f32 to vector<32x1xf32>
    %42 = arith.divf %40, %41 : vector<32x1xf32>
    %43 = arith.mulf %37, %37 : vector<32x1xf32>
    %44 = arith.subf %42, %43 : vector<32x1xf32>
    %cst_23 = arith.constant 0.000000e+00 : f32
    %45 = vector.broadcast %cst_23 : f32 to vector<32x1xf32>
    %46 = arith.maximumf %44, %45 : vector<32x1xf32>
    %cst_24 = arith.constant 9.99999974E-6 : f32
    %47 = vector.broadcast %cst_24 : f32 to vector<32x1xf32>
    %48 = arith.addf %46, %47 : vector<32x1xf32>
    %49 = math.rsqrt %48 : vector<32x1xf32>
    %50 = vector.broadcast %37 : vector<32x1xf32> to vector<32x32xf32>
    %51 = arith.subf %31, %50 : vector<32x32xf32>
    %52 = vector.broadcast %49 : vector<32x1xf32> to vector<32x32xf32>
    %53 = arith.mulf %51, %52 : vector<32x32xf32>
    %54 = vector.broadcast %32 : vector<1x32xf32> to vector<32x32xf32>
    %55 = arith.mulf %53, %54 : vector<32x32xf32>
    %56 = vector.broadcast %33 : vector<1x32xf32> to vector<32x32xf32>
    %57 = arith.addf %55, %56 : vector<32x32xf32>
    %c0_25 = arith.constant 0 : index
    %c0_26 = arith.constant 0 : index
    %58 = vector.load %arg8[%c0_25, %c0_26] : memref<32x32xf32, #tpu.memory_space<vmem>>, vector<32x32xf32>
    tpu.vector_store %arg8[%c0_25, %c0_26], %57 {strides = array<i32>} : memref<32x32xf32, #tpu.memory_space<vmem>>, vector<32x32xf32>,
    return
  }
  func.func @transform_0(%arg0: i32) -> (i32, i32) {
    %c0_i32 = arith.constant 0 : i32
    %c0_i32_0 = arith.constant 0 : i32
    return %arg0, %c0_i32 : i32, i32
  }
  func.func @transform_1(%arg0: i32) -> (i32, i32) {
    %c0_i32 = arith.constant 0 : i32
    %c0_i32_0 = arith.constant 0 : i32
    %c0_i32_1 = arith.constant 0 : i32
    return %c0_i32, %c0_i32_0 : i32, i32
  }
  func.func @transform_2(%arg0: i32) -> (i32, i32) {
    %c0_i32 = arith.constant 0 : i32
    %c0_i32_0 = arith.constant 0 : i32
    %c0_i32_1 = arith.constant 0 : i32
    return %c0_i32, %c0_i32_0 : i32, i32
  }
  func.func @transform_3(%arg0: i32) -> (i32, i32) {
    %c0_i32 = arith.constant 0 : i32
    %c0_i32_0 = arith.constant 0 : i32
    %c0_i32_1 = arith.constant 0 : i32
    return %c0_i32, %c0_i32_0 : i32, i32
  }
  func.func @transform_4(%arg0: i32) -> (i32, i32) {
    %c0_i32 = arith.constant 0 : i32
    %c0_i32_0 = arith.constant 0 : i32
    %c0_i32_1 = arith.constant 0 : i32
    return %c0_i32, %c0_i32_0 : i32, i32
  }
  func.func @transform_5(%arg0: i32) -> (i32, i32) {
    %c0_i32 = arith.constant 0 : i32
    %c0_i32_0 = arith.constant 0 : i32
    %c0_i32_1 = arith.constant 0 : i32
    return %c0_i32, %c0_i32_0 : i32, i32
  }
  func.func @transform_6(%arg0: i32) -> (i32, i32) {
    %c0_i32 = arith.constant 0 : i32
    %c0_i32_0 = arith.constant 0 : i32
    %c0_i32_1 = arith.constant 0 : i32
    return %c0_i32, %c0_i32_0 : i32, i32
  }
  func.func @transform_7(%arg0: i32) -> (i32, i32) {
    %c0_i32 = arith.constant 0 : i32
    %c0_i32_0 = arith.constant 0 : i32
    return %arg0, %c0_i32 : i32, i32
  }
}

</mosaic_0001>

<llo_original>
// kernel: dual_patch_norm.1
$region0: #{dual_patch_norm.1}
  #allocation0 [shape = 'u32[]', space=smem, size = 0x4, offset = 0x4, fixed_abs, tag = 'smem constant byte address 0x4 - core index']
  #allocation1 [shape = 'u32[144,128]{1,0:T(1,128)}', space=vmem, size = 0x12000, scoped, tag = 'internal scratch']
  %s0 = inlined_call_operand.vmem [shape: f32[32,64], index: 0, kind: input, shape index: {}]
  %s1 = inlined_call_operand.vmem [shape: f32[1,64], index: 1, kind: input, shape index: {}]
  %s2 = inlined_call_operand.vmem [shape: f32[1,64], index: 2, kind: input, shape index: {}]
  %s3 = inlined_call_operand.vmem [shape: f32[64,32], index: 3, kind: input, shape index: {}]
  %s4 = inlined_call_operand.vmem [shape: f32[1,32], index: 4, kind: input, shape index: {}]
  %s5 = inlined_call_operand.vmem [shape: f32[1,32], index: 5, kind: input, shape index: {}]
  %s6 = inlined_call_operand.vmem [shape: f32[1,32], index: 6, kind: input, shape index: {}]
  %s7 = inlined_call_operand.hbm [shape: f32[32,32], index: 7, kind: output, shape index: {}]
  %s8 = sld [smem:[#allocation0]]
  $region38: #{dual_patch_norm.1} parent=0
    _
  %s10 = ssub.s32 1, %s8
  %s11 = scalar_select 0, %s10, %s8
  $region1: #{dual_patch_norm.1} parent=0
    #allocation2 [shape = 'u8[16384]{0}', space=vmem, size = 0x4000, scoped, tag = 'output window, operand 0, single buffered']
    #allocation3 [shape = 's32[1]{0}', space=sflag, size = 0x4, scoped, tag = 'scoped memory for dual_patch_norm.1']
    %12 = vsyncpa [#allocation3], 0
    // Predicated region
    $region2: #{dual_patch_norm.1} parent=1 // pred_check
      _
    $region3: #{dual_patch_norm.1} parent=1 // pred_check_branch
      %14 = sbr.rel (0) target = $region5
    $region4: #{dual_patch_norm.1} parent=1 // pred_region
      _
    $region5: #{dual_patch_norm.1} parent=1 // pred_fallthru
      _
    // Predicated region
    $region6: #{dual_patch_norm.1} parent=1 // pred_check
      _
    $region7: #{dual_patch_norm.1} parent=1 // pred_check_branch
      %16 = sbr.rel (0) target = $region9
    $region8: #{dual_patch_norm.1} parent=1 // pred_region
      _
    $region9: #{dual_patch_norm.1} parent=1 // pred_fallthru
      _
    // Predicated region
    $region10: #{dual_patch_norm.1} parent=1 // pred_check
      _
    $region11: #{dual_patch_norm.1} parent=1 // pred_check_branch
      %18 = sbr.rel (0) target = $region13
    $region12: #{dual_patch_norm.1} parent=1 // pred_region
      _
    $region13: #{dual_patch_norm.1} parent=1 // pred_fallthru
      _
    // Predicated region
    $region14: #{dual_patch_norm.1} parent=1 // pred_check
      _
    $region15: #{dual_patch_norm.1} parent=1 // pred_check_branch
      %20 = sbr.rel (0) target = $region17
    $region16: #{dual_patch_norm.1} parent=1 // pred_region
      _
    $region17: #{dual_patch_norm.1} parent=1 // pred_fallthru
      _
    // Predicated region
    $region18: #{dual_patch_norm.1} parent=1 // pred_check
      _
    $region19: #{dual_patch_norm.1} parent=1 // pred_check_branch
      %22 = sbr.rel (0) target = $region21
    $region20: #{dual_patch_norm.1} parent=1 // pred_region
      _
    $region21: #{dual_patch_norm.1} parent=1 // pred_fallthru
      _
    // Predicated region
    $region22: #{dual_patch_norm.1} parent=1 // pred_check
      _
    $region23: #{dual_patch_norm.1} parent=1 // pred_check_branch
      %24 = sbr.rel (0) target = $region25
    $region24: #{dual_patch_norm.1} parent=1 // pred_region
      _
    $region25: #{dual_patch_norm.1} parent=1 // pred_fallthru
      _
    // Predicated region
    $region26: #{dual_patch_norm.1} parent=1 // pred_check
      _
    $region27: #{dual_patch_norm.1} parent=1 // pred_check_branch
      %26 = sbr.rel (0) target = $region29
    $region28: #{dual_patch_norm.1} parent=1 // pred_region
      _
    $region29: #{dual_patch_norm.1} parent=1 // pred_fallthru
      _
    %v27 = vld [vmem:[%s0] sm:$0xff]
    %v28 = vld [vmem:[%s0 + $0x8] sm:$0xff]
    %v29 = vld [vmem:[%s0 + $0x10] sm:$0xff]
    %v30 = vld [vmem:[%s0 + $0x18] sm:$0xff]
    %v31 = vld [vmem:[%s1] sm:$0x1]
    %v32 = vld [vmem:[%s2] sm:$0x1]
    %vm33 = vcmask 523264
    %v34 = vsel %vm33, %v27, 0.0
    %35 = vadd.xlane.f32.xlu0 %v34
    %v36 = vpop.xlane.xlu0 %35
    %v37 = vsel %vm33, %v28, 0.0
    %38 = vadd.xlane.f32.xlu0 %v37
    %v39 = vpop.xlane.xlu0 %38
    %v40 = vsel %vm33, %v29, 0.0
    %41 = vadd.xlane.f32.xlu0 %v40
    %v42 = vpop.xlane.xlu0 %41
    %v43 = vsel %vm33, %v30, 0.0
    %44 = vadd.xlane.f32.xlu0 %v43
    %v45 = vpop.xlane.xlu0 %44
    %v46 = vrcp.pop 64.0
    %v47 = vmul.f32 %v36, %v46
    %v48 = vmul.f32 %v39, %v46
    %v49 = vmul.f32 %v42, %v46
    %v50 = vmul.f32 %v45, %v46
    %v51 = vmul.f32 %v27, %v27
    %v52 = vmul.f32 %v28, %v28
    %v53 = vmul.f32 %v29, %v29
    %v54 = vmul.f32 %v30, %v30
    %v55 = vsel %vm33, %v51, 0.0
    %56 = vadd.xlane.f32.xlu0 %v55
    %v57 = vpop.xlane.xlu0 %56
    %v58 = vsel %vm33, %v52, 0.0
    %59 = vadd.xlane.f32.xlu0 %v58
    %v60 = vpop.xlane.xlu0 %59
    %v61 = vsel %vm33, %v53, 0.0
    %62 = vadd.xlane.f32.xlu0 %v61
    %v63 = vpop.xlane.xlu0 %62
    %v64 = vsel %vm33, %v54, 0.0
    %65 = vadd.xlane.f32.xlu0 %v64
    %v66 = vpop.xlane.xlu0 %65
    %v67 = vmul.f32 %v57, %v46
    %v68 = vmul.f32 %v60, %v46
    %v69 = vmul.f32 %v63, %v46
    %v70 = vmul.f32 %v66, %v46
    %v71 = vmul.f32 %v47, %v47
    %v72 = vmul.f32 %v48, %v48
    %v73 = vmul.f32 %v49, %v49
    %v74 = vmul.f32 %v50, %v50
    %v75 = vsub.f32 %v67, %v71
    %v76 = vsub.f32 %v68, %v72
    %v77 = vsub.f32 %v69, %v73
    %v78 = vsub.f32 %v70, %v74
    %v79 = vmax.f32 %v75, 0.0
    %v80 = vmax.f32 %v76, 0.0
    %v81 = vmax.f32 %v77, 0.0
    %v82 = vmax.f32 %v78, 0.0
    %v83 = vadd.f32 %v79, 1e-05
    %v84 = vadd.f32 %v80, 1e-05
    %v85 = vadd.f32 %v81, 1e-05
    %v86 = vadd.f32 %v82, 1e-05
    %v87 = vrsqrt.pop %v83
    %v88 = vrsqrt.pop %v84
    %v89 = vrsqrt.pop %v85
    %v90 = vrsqrt.pop %v86
    %v91 = vsub.f32 %v27, %v47
    %v92 = vsub.f32 %v28, %v48
    %v93 = vsub.f32 %v29, %v49
    %v94 = vsub.f32 %v30, %v50
    %v95 = vmul.f32 %v91, %v87
    %v96 = vmul.f32 %v92, %v88
    %v97 = vmul.f32 %v93, %v89
    %v98 = vmul.f32 %v94, %v90
    %v100 = vlaneseq
    %v101 = vshrl.u32 %v100, 7
    %v102 = vsub.s32 0, %v101
    %v103 = vrot.slane %v31, %v102
    %v105 = vmul.f32 %v95, %v103
    %v106 = vmul.f32 %v96, %v103
    %v107 = vmul.f32 %v97, %v103
    %v108 = vmul.f32 %v98, %v103
    %v110 = vlaneseq
    %v111 = vshrl.u32 %v110, 7
    %v112 = vsub.s32 0, %v111
    %v113 = vrot.slane %v32, %v112
    %v115 = vadd.f32 %v105, %v113
    %v116 = vadd.f32 %v106, %v113
    %v117 = vadd.f32 %v107, %v113
    %v118 = vadd.f32 %v108, %v113
    %v119 = vld [vmem:[%s3] sm:$0xff]
    %v120 = vld [vmem:[%s3 + $0x8] sm:$0xff]
    %v121 = vld [vmem:[%s3 + $0x10] sm:$0xff]
    %v122 = vld [vmem:[%s3 + $0x18] sm:$0xff]
    %v123 = vld [vmem:[%s3 + $0x20] sm:$0xff]
    %v124 = vld [vmem:[%s3 + $0x28] sm:$0xff]
    %v125 = vld [vmem:[%s3 + $0x30] sm:$0xff]
    %v126 = vld [vmem:[%s3 + $0x38] sm:$0xff]
    %v127 = vld [vmem:[%s4] sm:$0x1]
    %v129 = vlaneseq
    %v130 = vshrl.u32 %v129, 7
    %v131 = vsub.s32 0, %v130
    %v132 = vrot.slane %v127, %v131
    %v135 = vsel %vm33, %v115, 0
    %v138 = vsel %vm33, %v116, 0
    %v141 = vsel %vm33, %v117, 0
    %v144 = vsel %vm33, %v118, 0
    %146 = vmatprep.subr.mxu0 0.0
    %147 = vmatpush1.msra.mxu0 %v119
    %148 = vmatprep.subr.mxu0 0.0
    %149 = vmatpush1.msra.mxu0 %v120
    %150 = vmatprep.subr.mxu0 0.0
    %151 = vmatpush1.msra.mxu0 %v121
    %152 = vmatprep.subr.mxu0 0.0
    %153 = vmatpush1.msra.mxu0 %v122
    %154 = vmatprep.subr.mxu0 0.0
    %155 = vmatpush1.msra.mxu0 %v123
    %156 = vmatprep.subr.mxu0 0.0
    %157 = vmatpush1.msra.mxu0 %v124
    %158 = vmatprep.subr.mxu0 0.0
    %159 = vmatpush1.msra.mxu0 %v125
    %160 = vmatprep.subr.mxu0 0.0
    %161 = vmatpush1.msra.mxu0 %v126
    %162 = vmatprep.subr.mxu0 0.0
    %163 = vmatpush1.msra.mxu0 0.0
    %164 = vmatprep.subr.mxu0 0.0
    %165 = vmatpush1.msra.mxu0 0.0
    %166 = vmatprep.subr.mxu0 0.0
    %167 = vmatpush1.msra.mxu0 0.0
    %168 = vmatprep.subr.mxu0 0.0
    %169 = vmatpush1.msra.mxu0 0.0
    %170 = vmatprep.subr.mxu0 0.0
    %171 = vmatpush1.msra.mxu0 0.0
    %172 = vmatprep.subr.mxu0 0.0
    %173 = vmatpush1.msra.mxu0 0.0
    %174 = vmatprep.subr.mxu0 0.0
    %175 = vmatpush1.msra.mxu0 0.0
    %176 = vmatprep.subr.mxu0 0.0
    %177 = vmatpush1.msra.mxu0 0.0
    %178 = vmatprep.subr.mxu0 0.0
    %179 = vmatpush1.msra.mxu0 0.0
    %180 = vmatprep.subr.mxu0 0.0
    %181 = vmatpush1.msra.mxu0 0.0
    %182 = vmatprep.subr.mxu0 0.0
    %183 = vmatpush1.msra.mxu0 0.0
    %184 = vmatprep.subr.mxu0 0.0
    %185 = vmatpush1.msra.mxu0 0.0
    %186 = vmatprep.subr.mxu0 0.0
    %187 = vmatpush1.msra.mxu0 0.0
    %188 = vmatprep.subr.mxu0 0.0
    %189 = vmatpush1.msra.mxu0 0.0
    %190 = vmatprep.subr.mxu0 0.0
    %191 = vmatpush1.msra.mxu0 0.0
    %192 = vmatprep.subr.mxu0 0.0
    %193 = vmatpush1.msra.mxu0 0.0
    %194 = vmatprep.subr.mxu0 0.0
    %195 = vmatpush1.msra.mxu0 0.0
    %196 = vmatprep.subr.mxu0 0.0
    %197 = vmatpush1.msra.mxu0 0.0
    %198 = vmatprep.subr.mxu0 0.0
    %199 = vmatpush1.msra.mxu0 0.0
    %200 = vmatprep.subr.mxu0 0.0
    %201 = vmatpush1.msra.mxu0 0.0
    %202 = vmatprep.subr.mxu0 0.0
    %203 = vmatpush1.msra.mxu0 0.0
    %204 = vmatprep.subr.mxu0 0.0
    %205 = vmatpush1.msra.mxu0 0.0
    %206 = vmatprep.subr.mxu0 0.0
    %207 = vmatpush1.msra.mxu0 0.0
    %208 = vmatprep.subr.mxu0 0.0
    %209 = vmatpush1.msra.mxu0 0.0
    %210 = vmatprep.mubr.f32.mxu0 0.0
    %211 = vmatmul.mubr.f32.gmra.mrb[0].mxu0 %v135
    %v212 = vpop.f32.mrb[0].mxu0
    %v213 = vadd.f32 %v132, %v212
    %v214 = vpop.f32.mrb[0].mxu0
    %215 = vmatprep.mubr.f32.mxu0 0.0
    %216 = vmatmul.mubr.f32.gmra.mrb[0].mxu0 %v138
    %v217 = vpop.f32.mrb[0].mxu0
    %v218 = vadd.f32 %v132, %v217
    %v219 = vpop.f32.mrb[0].mxu0
    %220 = vmatprep.mubr.f32.mxu0 0.0
    %221 = vmatmul.mubr.f32.gmra.mrb[0].mxu0 %v141
    %v222 = vpop.f32.mrb[0].mxu0
    %v223 = vadd.f32 %v132, %v222
    %v224 = vpop.f32.mrb[0].mxu0
    %225 = vmatprep.mubr.f32.mxu0 0.0
    %226 = vmatmul.mubr.f32.gmra.mrb[0].mxu0 %v144
    %v227 = vpop.f32.mrb[0].mxu0
    %v228 = vadd.f32 %v132, %v227
    %v229 = vpop.f32.mrb[0].mxu0
    %230 = vdwg.mxu0
    %v231 = vld [vmem:[%s5] sm:$0x1]
    %v232 = vld [vmem:[%s6] sm:$0x1]
    %vm233 = vcmask 261120
    %v234 = vsel %vm233, %v213, 0.0
    %235 = vadd.xlane.f32.xlu0 %v234
    %v236 = vpop.xlane.xlu0 %235
    %v237 = vsel %vm233, %v218, 0.0
    %238 = vadd.xlane.f32.xlu0 %v237
    %v239 = vpop.xlane.xlu0 %238
    %v240 = vsel %vm233, %v223, 0.0
    %241 = vadd.xlane.f32.xlu0 %v240
    %v242 = vpop.xlane.xlu0 %241
    %v243 = vsel %vm233, %v228, 0.0
    %244 = vadd.xlane.f32.xlu0 %v243
    %v245 = vpop.xlane.xlu0 %244
    %v246 = vrcp.pop 32.0
    %v247 = vmul.f32 %v236, %v246
    %v248 = vmul.f32 %v239, %v246
    %v249 = vmul.f32 %v242, %v246
    %v250 = vmul.f32 %v245, %v246
    %v251 = vmul.f32 %v213, %v213
    %v252 = vmul.f32 %v218, %v218
    %v253 = vmul.f32 %v223, %v223
    %v254 = vmul.f32 %v228, %v228
    %v255 = vsel %vm233, %v251, 0.0
    %256 = vadd.xlane.f32.xlu0 %v255
    %v257 = vpop.xlane.xlu0 %256
    %v258 = vsel %vm233, %v252, 0.0
    %259 = vadd.xlane.f32.xlu0 %v258
    %v260 = vpop.xlane.xlu0 %259
    %v261 = vsel %vm233, %v253, 0.0
    %262 = vadd.xlane.f32.xlu0 %v261
    %v263 = vpop.xlane.xlu0 %262
    %v264 = vsel %vm233, %v254, 0.0
    %265 = vadd.xlane.f32.xlu0 %v264
    %v266 = vpop.xlane.xlu0 %265
    %v267 = vmul.f32 %v257, %v246
    %v268 = vmul.f32 %v260, %v246
    %v269 = vmul.f32 %v263, %v246
    %v270 = vmul.f32 %v266, %v246
    %v271 = vmul.f32 %v247, %v247
    %v272 = vmul.f32 %v248, %v248
    %v273 = vmul.f32 %v249, %v249
    %v274 = vmul.f32 %v250, %v250
    %v275 = vsub.f32 %v267, %v271
    %v276 = vsub.f32 %v268, %v272
    %v277 = vsub.f32 %v269, %v273
    %v278 = vsub.f32 %v270, %v274
    %v279 = vmax.f32 %v275, 0.0
    %v280 = vmax.f32 %v276, 0.0
    %v281 = vmax.f32 %v277, 0.0
    %v282 = vmax.f32 %v278, 0.0
    %v283 = vadd.f32 %v279, 1e-05
    %v284 = vadd.f32 %v280, 1e-05
    %v285 = vadd.f32 %v281, 1e-05
    %v286 = vadd.f32 %v282, 1e-05
    %v287 = vrsqrt.pop %v283
    %v288 = vrsqrt.pop %v284
    %v289 = vrsqrt.pop %v285
    %v290 = vrsqrt.pop %v286
    %v291 = vsub.f32 %v213, %v247
    %v292 = vsub.f32 %v218, %v248
    %v293 = vsub.f32 %v223, %v249
    %v294 = vsub.f32 %v228, %v250
    %v295 = vmul.f32 %v291, %v287
    %v296 = vmul.f32 %v292, %v288
    %v297 = vmul.f32 %v293, %v289
    %v298 = vmul.f32 %v294, %v290
    %v300 = vlaneseq
    %v301 = vshrl.u32 %v300, 7
    %v302 = vsub.s32 0, %v301
    %v303 = vrot.slane %v231, %v302
    %v305 = vmul.f32 %v295, %v303
    %v306 = vmul.f32 %v296, %v303
    %v307 = vmul.f32 %v297, %v303
    %v308 = vmul.f32 %v298, %v303
    %v310 = vlaneseq
    %v311 = vshrl.u32 %v310, 7
    %v312 = vsub.s32 0, %v311
    %v313 = vrot.slane %v232, %v312
    %v315 = vadd.f32 %v305, %v313
    %v316 = vadd.f32 %v306, %v313
    %v317 = vadd.f32 %v307, %v313
    %v318 = vadd.f32 %v308, %v313
    %319 = vst.msk [vmem:[#allocation2] sm:$0xff] %vm233, %v315
    %320 = vst.msk [vmem:[#allocation2 + $0x8] sm:$0xff] %vm233, %v316
    %321 = vst.msk [vmem:[#allocation2 + $0x10] sm:$0xff] %vm233, %v317
    %322 = vst.msk [vmem:[#allocation2 + $0x18] sm:$0xff] %vm233, %v318
    // Predicated region
    $region30: #{dual_patch_norm.1} parent=1 // pred_check
      _
    $region31: #{dual_patch_norm.1} parent=1 // pred_check_branch
      %324 = sbr.rel (0) target = $region33
    $region32: #{dual_patch_norm.1} parent=1 // pred_region
      %s326 = ssub.s32 512, 512
      %327 = vsyncadd [#allocation3], %s326
      %s328 = sshll.u32 [#allocation2], 4
      %s329 = int_to_ptr.vmem [resolvable:$true] %s328
      %334 = dma.vmem_to_hbm [thread:$0]  %s329, 512, %s7, [#allocation3], 128, 128, 8
    $region33: #{dual_patch_norm.1} parent=1 // pred_fallthru
      _
    // Predicated region
    $region34: #{dual_patch_norm.1} parent=1 // pred_check
      _
    $region35: #{dual_patch_norm.1} parent=1 // pred_check_branch
      %336 = sbr.rel (0) target = $region37
    $region36: #{dual_patch_norm.1} parent=1 // pred_region
      %337 = dma.done [#allocation3], 512
    $region37: #{dual_patch_norm.1} parent=1 // pred_fallthru
      _
    %338 = vsyncpa [#allocation3], 1

</llo_original>
